<compile_context>
chip_gen: v5e
topology: v5e:2x2
jax: 0.10.0
libtpu: 0.0.40
codegen_flags: <defaults>
</compile_context>

<pallas_src>
import math
import functools

import jax
import jax.numpy as jnp
from jax.experimental import pallas as pl
from jax.experimental.pallas import tpu as pltpu

EPS = 1e-5  # PyTorch BatchNorm1d default


# ---------------------------------------------------------------------------
# helpers
# ---------------------------------------------------------------------------
def _round_up(v, m):
    return (v + m - 1) // m * m


def _vmem_limit_bytes():
    """Scoped-VMEM limit with headroom, re-derived per chip (v7x has 64 MiB physical)."""
    try:
        cap = int(pltpu.get_tpu_info().vmem_capacity_bytes)
        return min(cap * 3 // 4, 96 * 1024 * 1024)
    except Exception:
        return 48 * 1024 * 1024


def _pick_tn(o_pad, k_lane, w_itemsize, vmem_limit):
    """Largest multiple-of-128 divisor of O_pad whose double-buffered W tile fits ~1/4 of VMEM.

    Returns O_pad itself (weight fully VMEM-resident, n_o == 1) in the common case.
    """
    budget = vmem_limit // 4
    d = o_pad
    while d > 128:
        if o_pad % d == 0 and 2 * d * k_lane * w_itemsize <= budget:
            return d
        d -= 128
    return 128


def _pick_tm(m, k_lane, tn, x_itemsize, w_itemsize, out_itemsize, vmem_limit):
    """Biggest M tile (<= 2048) whose double-buffered blocks fit the per-chip VMEM budget.

    Uses lane-padded sizes (K padded to 128 in VMEM) so the estimate holds on v7x's 64 MiB.
    """
    budget = int(vmem_limit * 0.6)                 # headroom for Mosaic internal scratch
    w_bytes = 2 * tn * k_lane * w_itemsize         # weight block, double-buffered
    per_row = (2 * k_lane * x_itemsize             # x block, double-buffered (lane-padded K)
               + 2 * tn * out_itemsize             # output block, double-buffered
               + tn * 4)                           # in-flight f32 z tile
    tm = (budget - w_bytes) // max(per_row, 1)
    tm = max(8, min(2048, int(tm)))
    if tm >= m:
        return m                                   # single block (block dim == full dim is legal)
    align = 16 if min(x_itemsize, w_itemsize, out_itemsize) < 4 else 8
    return max(align, (tm // align) * align)


# ---------------------------------------------------------------------------
# Kernel 1: accumulate xsum = 1^T x and the Gram matrix G = x^T x over all rows.
#   grid = (M-tiles,)  (reduction axis; xsum / G blocks are resident accumulators).
#   Cost is M*K^2, independent of O; no weight needed; x read from HBM exactly once.
# ---------------------------------------------------------------------------
def _stats_kernel(x_ref, xsum_ref, gram_ref, *, m_total, tm):
    m_idx = pl.program_id(0)

    x = x_ref[...].astype(jnp.float32)
    if m_total % tm != 0:
        # Ragged last M tile: rows >= m_total hold unspecified data.  Zero them so the sums
        # stay exact without any host-side padding pass over x.
        rows = jax.lax.broadcasted_iota(jnp.int32, x.shape, 0) + m_idx * tm
        x = jnp.where(rows < m_total, x, 0.0)

    @pl.when(m_idx == 0)
    def _():
        xsum_ref[...] = jnp.zeros_like(xsum_ref)
        gram_ref[...] = jnp.zeros_like(gram_ref)

    xsum_ref[...] += jnp.sum(x, axis=0, keepdims=True)
    gram_ref[...] += jax.lax.dot_general(
        x, x,
        dimension_numbers=(((0,), (0,)), ((), ())),   # x^T x  -> (K, K)
        preferred_element_type=jnp.float32,
    )


# ---------------------------------------------------------------------------
# Kernel 2: recompute z = x @ W^T and fuse the (pre-folded) BN affine + ReLU.
#   grid = (M-tiles, O-tiles) with O innermost: the x block index is constant across the
#   inner loop, so x streams from HBM exactly once; only the small W tile re-streams.
# ---------------------------------------------------------------------------
def _apply_kernel(x_ref, w_ref, scale_ref, shift_ref, o_ref, *, compute_dtype):
    x = x_ref[...]
    if x.dtype != compute_dtype:
        x = x.astype(compute_dtype)                  # in-kernel cast: no extra HBM pass over x
    z = jax.lax.dot_general(
        x, w_ref[...],
        dimension_numbers=(((1,), (1,)), ((), ())),  # contract K of x with K of (O, K) weight
        preferred_element_type=jnp.float32,
    )
    y = jnp.maximum(z * scale_ref[...] + shift_ref[...], 0.0)
    o_ref[...] = y.astype(o_ref.dtype)


# ---------------------------------------------------------------------------
# Wrapper
# ---------------------------------------------------------------------------
def linear_block_forward(x, weight, bias, gamma, beta, *,
                         compute_dtype=jnp.float32, out_dtype=None, _force_tm=None):
    """x: (B, N, in_features) -> (B, N, out_features); training-mode BN over the (B*N) axis.

    `bias` is accepted for API fidelity but not used: a constant per-feature shift before
    training-mode BatchNorm cancels exactly (mean absorbs it, variance is shift-invariant).
    Set compute_dtype=jnp.bfloat16 and/or out_dtype=jnp.bfloat16 on v6e/v7x for MXU/bandwidth
    gains (f32 accumulation and f32 BN math are kept either way).
    """
    del bias  # exact no-op under training-mode BN
    B, N, K = x.shape
    O = weight.shape[0]            # weight: (out_features, in_features), as in nn.Linear
    M = B * N
    out_dtype = x.dtype if out_dtype is None else out_dtype

    # --- tiling --------------------------------------------------------------------------
    O_pad = _round_up(O, 128)                      # lane-dense output stores / full MXU tiles
    k_lane = _round_up(max(K, 128), 128)           # VMEM lane padding of the K (last) dim
    vmem_limit = _vmem_limit_bytes()
    x_isz = jnp.dtype(x.dtype).itemsize
    w_isz = jnp.dtype(compute_dtype).itemsize
    o_isz = jnp.dtype(out_dtype).itemsize

    tn = _pick_tn(O_pad, k_lane, w_isz, vmem_limit)
    tm = _pick_tm(M, k_lane, tn, x_isz, w_isz, o_isz, vmem_limit)
    if _force_tm is not None:                      # test hook: exercise the ragged-M path
        tm = min(int(_force_tm), M)
    n_m = pl.cdiv(M, tm)
    n_o = O_pad // tn

    # --- operands (no pad / astype / slice over the big M axis) ---------------------------
    x2d = x.reshape(M, K)                          # collapse leading dims; no copy
    w_f32 = weight.astype(jnp.float32)
    if O_pad != O:
        w_f32 = jnp.pad(w_f32, ((0, O_pad - O), (0, 0)))   # W is small
    w_mx = w_f32.astype(compute_dtype)             # kept as (O_pad, K): no W^T copy in HBM
    gamma_p = gamma.astype(jnp.float32).reshape(1, O)
    beta_p = beta.astype(jnp.float32).reshape(1, O)
    if O_pad != O:
        gamma_p = jnp.pad(gamma_p, ((0, 0), (0, O_pad - O)))
        beta_p = jnp.pad(beta_p, ((0, 0), (0, O_pad - O)))

    # --- Pass 1: xsum and Gram matrix of x (O-independent stats) --------------------------
    xsum, gram = pl.pallas_call(
        functools.partial(_stats_kernel, m_total=M, tm=tm),
        out_shape=(
            jax.ShapeDtypeStruct((1, K), jnp.float32),
            jax.ShapeDtypeStruct((K, K), jnp.float32),
        ),
        grid=(n_m,),
        in_specs=[pl.BlockSpec((tm, K), lambda m: (m, 0))],
        out_specs=(
            pl.BlockSpec((1, K), lambda m: (0, 0)),
            pl.BlockSpec((K, K), lambda m: (0, 0)),
        ),
        compiler_params=pltpu.CompilerParams(
            dimension_semantics=("arbitrary",),
            vmem_limit_bytes=vmem_limit,
        ),
    )(x2d)

    # --- BN scale/shift folded once (tiny O_pad*K^2 plain-JAX op; hoisted out of the loop) --
    m_total = jnp.float32(M)
    sum_z = xsum @ w_f32.T                                        # (1, O_pad): sum_m z[m, :]
    ssq_z = jnp.sum((w_f32 @ gram) * w_f32, axis=1).reshape(1, O_pad)  # sum_m z[m, :]**2
    mean = sum_z / m_total
    var = jnp.maximum(ssq_z / m_total - mean * mean, 0.0)         # biased var; clamp vs. cancellation
    rstd = jax.lax.rsqrt(var + EPS)
    scale = gamma_p * rstd
    shift = beta_p - mean * scale

    # --- Pass 2: recompute z, apply y = max(z*scale + shift, 0) ----------------------------
    y2d = pl.pallas_call(
        functools.partial(_apply_kernel, compute_dtype=compute_dtype),
        out_shape=jax.ShapeDtypeStruct((M, O_pad), out_dtype),
        grid=(n_m, n_o),   # M outer ("parallel" for the v7x core split), O inner (x streamed once)
        in_specs=[
            pl.BlockSpec((tm, K), lambda m, o: (m, 0)),
            pl.BlockSpec((tn, K), lambda m, o: (o, 0)),
            pl.BlockSpec((1, tn), lambda m, o: (0, o)),
            pl.BlockSpec((1, tn), lambda m, o: (0, o)),
        ],
        out_specs=pl.BlockSpec((tm, tn), lambda m, o: (m, o)),
        compiler_params=pltpu.CompilerParams(
            dimension_semantics=("parallel", "arbitrary"),
            vmem_limit_bytes=vmem_limit,
        ),
    )(x2d, w_mx, scale, shift)

    if O_pad != O:
        y2d = y2d[:, :O]          # only slice when O is not already lane-dense
    return y2d.reshape(B, N, O)


# ---------------------------------------------------------------------------
# Pure-JAX reference mirroring the PyTorch forward (training-mode BN).
# ---------------------------------------------------------------------------
def _reference(x, weight, bias, gamma, beta):
    B, N, K = x.shape
    O = weight.shape[0]
    z = x.reshape(B * N, K) @ weight.T + bias               # fc (dropout p=0 is identity)
    mean = z.mean(axis=0)
    var = ((z - mean) ** 2).mean(axis=0)                    # biased variance
    zn = (z - mean) / jnp.sqrt(var + EPS)
    y = jnp.maximum(zn * gamma + beta, 0.0)                 # BN affine + ReLU
    return y.reshape(B, N, O)


if __name__ == "__main__":
    in_features, out_features = 32, 32

    key = jax.random.PRNGKey(0)
    kx, kw, kb, kx2 = jax.random.split(key, 4)

    # Deterministic parameter init matching LinearBlock.__init__:
    #   fc.weight ~ N(0, sqrt(2/out_features)); fc.bias ~ U(-1/sqrt(in), 1/sqrt(in))
    #   bn.weight = 1, bn.bias = 0
    weight = jax.random.normal(kw, (out_features, in_features), dtype=jnp.float32) * math.sqrt(
        2.0 / out_features
    )
    bound = 1.0 / math.sqrt(in_features)
    bias = jax.random.uniform(kb, (out_features,), minval=-bound, maxval=bound, dtype=jnp.float32)
    gamma = jnp.ones((out_features,), dtype=jnp.float32)
    beta = jnp.zeros((out_features,), dtype=jnp.float32)

    # Main check: B=2, N=8 (single M tile).
    x = jax.random.normal(kx, (2, 8, in_features), dtype=jnp.float32)
    y = jax.block_until_ready(linear_block_forward(x, weight, bias, gamma, beta))
    y_ref = _reference(x, weight, bias, gamma, beta)
    assert y.shape == y_ref.shape
    assert jnp.allclose(y, y_ref, atol=1e-3, rtol=1e-3), "mismatch vs. reference"

    # Second check: non-divisible M with a forced small tile -> exercises the ragged-tail
    # masking path (no host-side padding) and the partial output writeback.
    x2 = jax.random.normal(kx2, (2, 11, in_features), dtype=jnp.float32)   # M = 22
    y2 = jax.block_until_ready(linear_block_forward(x2, weight, bias, gamma, beta, _force_tm=8))
    y2_ref = _reference(x2, weight, bias, gamma, beta)
    assert y2.shape == y2_ref.shape
    assert jnp.allclose(y2, y2_ref, atol=1e-3, rtol=1e-3), "mismatch vs. reference (ragged M)"

    print("KERNEL_OK")
</pallas_src>

<mosaic_0001>
module attributes {stable_mosaic.version = 11 : i64} {
  func.func @_stats_kernel(%arg0: i32, %arg1: memref<16x32xf32, #tpu.memory_space<vmem>>, %arg2: memref<1x32xf32, #tpu.memory_space<vmem>>, %arg3: memref<32x32xf32, #tpu.memory_space<vmem>>) attributes {dimension_semantics = [#tpu.dimension_semantics<arbitrary>], iteration_bounds = array<i64: 1>, scalar_prefetch = 0 : i64, scratch_operands = 0 : i64, tpu.core_type = #tpu.core_type<tc>, window_params = [{transform_indices = @transform_0, window_bounds = array<i64: 16, 32>}, {pipeline_mode = #tpu.pipeline_mode<synchronous>, transform_indices = @transform_1, window_bounds = array<i64: 1, 32>}, {pipeline_mode = #tpu.pipeline_mode<synchronous>, transform_indices = @transform_2, window_bounds = array<i64: 32, 32>}]} {
    %c0 = arith.constant 0 : index
    %c0_0 = arith.constant 0 : index
    %0 = vector.load %arg1[%c0, %c0_0] : memref<16x32xf32, #tpu.memory_space<vmem>>, vector<16x32xf32>
    %c0_i32 = arith.constant 0 : i32
    %1 = arith.cmpi eq, %arg0, %c0_i32 : i32
    %2 = arith.extui %1 : i1 to i32
    %c0_i32_1 = arith.constant 0 : i32
    %3 = arith.cmpi ne, %2, %c0_i32_1 : i32
    scf.if %3 {
      %cst_11 = arith.constant 0.000000e+00 : f32
      %13 = vector.broadcast %cst_11 : f32 to vector<1x32xf32>
      %c0_12 = arith.constant 0 : index
      %c0_13 = arith.constant 0 : index
      %14 = vector.load %arg2[%c0_12, %c0_13] : memref<1x32xf32, #tpu.memory_space<vmem>>, vector<1x32xf32>
      tpu.vector_store %arg2[%c0_12, %c0_13], %13 {strides = array<i32>} : memref<1x32xf32, #tpu.memory_space<vmem>>, vector<1x32xf32>,
      %cst_14 = arith.constant 0.000000e+00 : f32
      %15 = vector.broadcast %cst_14 : f32 to vector<32x32xf32>
      %c0_15 = arith.constant 0 : index
      %c0_16 = arith.constant 0 : index
      %16 = vector.load %arg3[%c0_15, %c0_16] : memref<32x32xf32, #tpu.memory_space<vmem>>, vector<32x32xf32>
      tpu.vector_store %arg3[%c0_15, %c0_16], %15 {strides = array<i32>} : memref<32x32xf32, #tpu.memory_space<vmem>>, vector<32x32xf32>,
    } else {
    }
    %c0_2 = arith.constant 0 : index
    %c0_3 = arith.constant 0 : index
    %4 = vector.load %arg2[%c0_2, %c0_3] : memref<1x32xf32, #tpu.memory_space<vmem>>, vector<1x32xf32>
    %cst = arith.constant dense<0.000000e+00> : vector<32xf32>
    %5 = vector.multi_reduction <add>, %0, %cst [0] : vector<16x32xf32> to vector<32xf32>
    %6 = vector.shape_cast %5 : vector<32xf32> to vector<1x32xf32>
    %7 = arith.addf %4, %6 : vector<1x32xf32>
    %c0_4 = arith.constant 0 : index
    %c0_5 = arith.constant 0 : index
    %8 = vector.load %arg2[%c0_4, %c0_5] : memref<1x32xf32, #tpu.memory_space<vmem>>, vector<1x32xf32>
    tpu.vector_store %arg2[%c0_4, %c0_5], %7 {strides = array<i32>} : memref<1x32xf32, #tpu.memory_space<vmem>>, vector<1x32xf32>,
    %c0_6 = arith.constant 0 : index
    %c0_7 = arith.constant 0 : index
    %9 = vector.load %arg3[%c0_6, %c0_7] : memref<32x32xf32, #tpu.memory_space<vmem>>, vector<32x32xf32>
    %cst_8 = arith.constant dense<0.000000e+00> : vector<32x32xf32>
    %10 = tpu.matmul %0, %0, %cst_8 {dimension_numbers = #tpu.dot_dimension_numbers<[0], [0], [1], [1], [0, 1, 1, 1], [], []>} : vector<16x32xf32>, vector<16x32xf32>, vector<32x32xf32> -> vector<32x32xf32>
    %11 = arith.addf %9, %10 : vector<32x32xf32>
    %c0_9 = arith.constant 0 : index
    %c0_10 = arith.constant 0 : index
    %12 = vector.load %arg3[%c0_9, %c0_10] : memref<32x32xf32, #tpu.memory_space<vmem>>, vector<32x32xf32>
    tpu.vector_store %arg3[%c0_9, %c0_10], %11 {strides = array<i32>} : memref<32x32xf32, #tpu.memory_space<vmem>>, vector<32x32xf32>,
    return
  }
  func.func @transform_0(%arg0: i32) -> (i32, i32) {
    %c0_i32 = arith.constant 0 : i32
    %c0_i32_0 = arith.constant 0 : i32
    return %arg0, %c0_i32 : i32, i32
  }
  func.func @transform_1(%arg0: i32) -> (i32, i32) {
    %c0_i32 = arith.constant 0 : i32
    %c0_i32_0 = arith.constant 0 : i32
    %c0_i32_1 = arith.constant 0 : i32
    return %c0_i32, %c0_i32_0 : i32, i32
  }
  func.func @transform_2(%arg0: i32) -> (i32, i32) {
    %c0_i32 = arith.constant 0 : i32
    %c0_i32_0 = arith.constant 0 : i32
    %c0_i32_1 = arith.constant 0 : i32
    return %c0_i32, %c0_i32_0 : i32, i32
  }
}

</mosaic_0001>

<llo_original>
// kernel: tpu_custom_call.1
$region0: #{tpu_custom_call.1}
  #allocation0 [shape = 'u32[]', space=smem, size = 0x4, offset = 0x4, fixed_abs, tag = 'smem constant byte address 0x4 - core index']
  #allocation1 [shape = 'u32[72,128]{1,0:T(1,128)}', space=vmem, size = 0x9000, scoped, tag = 'internal scratch']
  %s0 = inlined_call_operand.hbm [shape: f32[16,32], index: 0, kind: input, shape index: {}]
  %s1 = inlined_call_operand.hbm [shape: f32[1,32], index: 1, kind: output, shape index: {0}]
  %s2 = inlined_call_operand.hbm [shape: f32[32,32], index: 2, kind: output, shape index: {1}]
  %3 = xla_tuple %s1, %s2
  %s4 = sld [smem:[#allocation0]]
  $region30: #{tpu_custom_call.1} parent=0
    _
  %s6 = ssub.s32 1, %s4
  %s7 = scalar_select 0, %s6, %s4
  $region1: #{tpu_custom_call.1} parent=0
    #allocation2 [shape = 'u8[8192]{0}', space=vmem, size = 0x2000, scoped, tag = 'input window, operand 0, single buffered']
    #allocation3 [shape = 's32[1]{0}', space=sflag, size = 0x4, scoped, tag = 'scoped memory for tpu_custom_call.1']
    #allocation4 [shape = 's32[1]{0}', space=sflag, size = 0x4, scoped, tag = 'scoped memory for tpu_custom_call.1']
    #allocation5 [shape = 'u8[512]{0}', space=vmem, size = 0x400, scoped, tag = 'output window, operand 0, single buffered']
    #allocation6 [shape = 'u8[16384]{0}', space=vmem, size = 0x4000, scoped, tag = 'output window, operand 1, single buffered']
    #allocation7 [shape = 's32[1]{0}', space=sflag, size = 0x4, scoped, tag = 'scoped memory for tpu_custom_call.1']
    %8 = vsyncpa [#allocation3], 0
    %9 = vsyncpa [#allocation4], 0
    %10 = vsyncpa [#allocation7], 0
    // Predicated region
    $region2: #{tpu_custom_call.1} parent=1 // pred_check
      _
    $region3: #{tpu_custom_call.1} parent=1 // pred_check_branch
      %12 = sbr.rel (0) target = $region5
    $region4: #{tpu_custom_call.1} parent=1 // pred_region
      %14 = vsyncadd [#allocation3], 0
      %s15 = sshll.u32 %s0, 4
      %s16 = int_to_ptr.hbm [resolvable:$true] %s15
      %s17 = sshll.u32 [#allocation2], 4
      %s18 = int_to_ptr.vmem [resolvable:$true] %s17
      %23 = dma.hbm_to_vmem [thread:$0]  %s16, 256, %s18, [#allocation3], 128, 128, 8
    $region5: #{tpu_custom_call.1} parent=1 // pred_fallthru
      _
    // Predicated region
    $region6: #{tpu_custom_call.1} parent=1 // pred_check
      _
    $region7: #{tpu_custom_call.1} parent=1 // pred_check_branch
      %25 = sbr.rel (0) target = $region9
    $region8: #{tpu_custom_call.1} parent=1 // pred_region
      %27 = dma.done [#allocation3], 256
    $region9: #{tpu_custom_call.1} parent=1 // pred_fallthru
      _
    %v28 = vld [vmem:[#allocation2] sm:$0xff]
    %v29 = vld [vmem:[#allocation2 + $0x8] sm:$0xff]
    %p30 = scmp.eq.s32.totalorder 0, 0
    // Predicated region
    $region10: #{tpu_custom_call.1} parent=1 // pred_check
      %p31 = pneg %p30
    $region11: #{tpu_custom_call.1} parent=1 // pred_check_branch
      %33 = sbr.rel (%p31) target = $region13
    $region12: #{tpu_custom_call.1} parent=1 // pred_region
      %vm34 = vcmask 253952
      %35 = vst.msk [vmem:[#allocation5] sm:$0x1] %vm34, 0.0
      %vm36 = vcmask 261120
      %37 = vst.msk [vmem:[#allocation6] sm:$0xff] %vm36, 0.0
      %38 = vst.msk [vmem:[#allocation6 + $0x8] sm:$0xff] %vm36, 0.0
      %39 = vst.msk [vmem:[#allocation6 + $0x10] sm:$0xff] %vm36, 0.0
      %40 = vst.msk [vmem:[#allocation6 + $0x18] sm:$0xff] %vm36, 0.0
    $region13: #{tpu_custom_call.1} parent=1 // pred_fallthru
      _
    %v41 = vld [vmem:[#allocation5] sm:$0x1]
    %vm42 = vcmask 261120
    %v43 = vsel %vm42, %v28, 0.0
    %v44 = vsel %vm42, %v29, 0.0
    %v45 = vadd.f32 %v43, %v44
    %v46 = vrot.slane %v45, 4
    %v47 = vadd.f32 %v45, %v46
    %v48 = vrot.slane %v47, 2
    %v49 = vadd.f32 %v47, %v48
    %v50 = vrot.slane %v49, 1
    %v51 = vadd.f32 %v49, %v50
    %v52 = vadd.f32 %v41, %v51
    %vm53 = vcmask 253952
    %54 = vst.msk [vmem:[#allocation5] sm:$0x1] %vm53, %v52
    %v55 = vld [vmem:[#allocation6] sm:$0xff]
    %v56 = vld [vmem:[#allocation6 + $0x8] sm:$0xff]
    %v57 = vld [vmem:[#allocation6 + $0x10] sm:$0xff]
    %v58 = vld [vmem:[#allocation6 + $0x18] sm:$0xff]
    %59 = vxpose.xlu0.b32.start [1/16] %v28, 128
    %60 = vxpose.xlu0.b32.cont [2/16] %v29, 128
    %61 = vxpose.xlu0.b32.cont [3/16] 0.0, 128
    %62 = vxpose.xlu0.b32.cont [4/16] 0.0, 128
    %63 = vxpose.xlu0.b32.cont [5/16] 0.0, 128
    %64 = vxpose.xlu0.b32.cont [6/16] 0.0, 128
    %65 = vxpose.xlu0.b32.cont [7/16] 0.0, 128
    %66 = vxpose.xlu0.b32.cont [8/16] 0.0, 128
    %67 = vxpose.xlu0.b32.cont [9/16] 0.0, 128
    %68 = vxpose.xlu0.b32.cont [10/16] 0.0, 128
    %69 = vxpose.xlu0.b32.cont [11/16] 0.0, 128
    %70 = vxpose.xlu0.b32.cont [12/16] 0.0, 128
    %71 = vxpose.xlu0.b32.cont [13/16] 0.0, 128
    %72 = vxpose.xlu0.b32.cont [14/16] 0.0, 128
    %73 = vxpose.xlu0.b32.cont [15/16] 0.0, 128
    %74 = vxpose.xlu0.b32.end [16/16] 0.0, 128
    %v75 = vpop.trf.xlu0
    %v76 = vpop.trf.xlu0
    %v77 = vpop.trf.xlu0
    %v78 = vpop.trf.xlu0
    %v79 = vpop.trf.xlu0
    %v80 = vpop.trf.xlu0
    %v81 = vpop.trf.xlu0
    %v82 = vpop.trf.xlu0
    %v83 = vpop.trf.xlu0
    %v84 = vpop.trf.xlu0
    %v85 = vpop.trf.xlu0
    %v86 = vpop.trf.xlu0
    %v87 = vpop.trf.xlu0
    %v88 = vpop.trf.xlu0
    %v89 = vpop.trf.xlu0
    %v90 = vpop.trf.xlu0
    %vm91 = vcmask 130048
    %v93 = vsel %vm91, %v75, 0
    %v96 = vsel %vm91, %v76, 0
    %v99 = vsel %vm91, %v77, 0
    %v102 = vsel %vm91, %v78, 0
    %104 = vmatpush.msra.mxu0 0.0
    %105 = vmatpush.msra.mxu0 0.0
    %106 = vmatpush.msra.mxu0 0.0
    %107 = vmatpush.msra.mxu0 0.0
    %108 = vmatpush.msra.mxu0 0.0
    %109 = vmatpush.msra.mxu0 0.0
    %110 = vmatpush.msra.mxu0 0.0
    %111 = vmatpush.msra.mxu0 0.0
    %112 = vmatpush.msra.mxu0 0.0
    %113 = vmatpush.msra.mxu0 0.0
    %114 = vmatpush.msra.mxu0 0.0
    %115 = vmatpush.msra.mxu0 0.0
    %116 = vmatpush.msra.mxu0 0.0
    %117 = vmatpush.msra.mxu0 0.0
    %118 = vmatpush.msra.mxu0 %v29
    %119 = vmatpush.msra.mxu0 %v28
    %120 = vmatmul.f32.gmra.mxu0 %v93
    %v121 = vpop.f32.mrf.mxu0
    %v122 = vadd.f32 0.0, %v121
    %123 = vmatmul.f32.gmra.mxu0 %v96
    %v124 = vpop.f32.mrf.mxu0
    %v125 = vadd.f32 0.0, %v124
    %126 = vmatmul.f32.gmra.mxu0 %v99
    %v127 = vpop.f32.mrf.mxu0
    %v128 = vadd.f32 0.0, %v127
    %129 = vmatmul.f32.gmra.mxu0 %v102
    %v130 = vpop.f32.mrf.mxu0
    %v131 = vadd.f32 0.0, %v130
    %132 = vdwg.mxu0
    %v133 = vadd.f32 %v55, %v122
    %v134 = vadd.f32 %v56, %v125
    %v135 = vadd.f32 %v57, %v128
    %v136 = vadd.f32 %v58, %v131
    %137 = vst.msk [vmem:[#allocation6] sm:$0xff] %vm42, %v133
    %138 = vst.msk [vmem:[#allocation6 + $0x8] sm:$0xff] %vm42, %v134
    %139 = vst.msk [vmem:[#allocation6 + $0x10] sm:$0xff] %vm42, %v135
    %140 = vst.msk [vmem:[#allocation6 + $0x18] sm:$0xff] %vm42, %v136
    // Predicated region
    $region14: #{tpu_custom_call.1} parent=1 // pred_check
      _
    $region15: #{tpu_custom_call.1} parent=1 // pred_check_branch
      %142 = sbr.rel (0) target = $region17
    $region16: #{tpu_custom_call.1} parent=1 // pred_region
      %144 = vsyncadd [#allocation4], 0
      %s146 = sshll.u32 [#allocation5], 4
      %s147 = int_to_ptr.vmem [resolvable:$true] %s146
      %s148 = sshll.u32 %s1, 4
      %s149 = int_to_ptr.hbm [resolvable:$true] %s148
      %151 = dma.vmem_to_hbm [thread:$0]  %s147, 16, %s149, [#allocation4]
    $region17: #{tpu_custom_call.1} parent=1 // pred_fallthru
      _
    // Predicated region
    $region18: #{tpu_custom_call.1} parent=1 // pred_check
      _
    $region19: #{tpu_custom_call.1} parent=1 // pred_check_branch
      %153 = sbr.rel (0) target = $region21
    $region20: #{tpu_custom_call.1} parent=1 // pred_region
      %155 = vsyncadd [#allocation7], 0
      %s156 = sshll.u32 [#allocation6], 4
      %s157 = int_to_ptr.vmem [resolvable:$true] %s156
      %s158 = sshll.u32 %s2, 4
      %s159 = int_to_ptr.hbm [resolvable:$true] %s158
      %164 = dma.vmem_to_hbm [thread:$0]  %s157, 512, %s159, [#allocation7], 128, 128, 8
    $region21: #{tpu_custom_call.1} parent=1 // pred_fallthru
      _
    // Predicated region
    $region22: #{tpu_custom_call.1} parent=1 // pred_check
      _
    $region23: #{tpu_custom_call.1} parent=1 // pred_check_branch
      %166 = sbr.rel (0) target = $region25
    $region24: #{tpu_custom_call.1} parent=1 // pred_region
      %168 = dma.done [#allocation4], 16
    $region25: #{tpu_custom_call.1} parent=1 // pred_fallthru
      _
    // Predicated region
    $region26: #{tpu_custom_call.1} parent=1 // pred_check
      _
    $region27: #{tpu_custom_call.1} parent=1 // pred_check_branch
      %170 = sbr.rel (0) target = $region29
    $region28: #{tpu_custom_call.1} parent=1 // pred_region
      %172 = dma.done [#allocation7], 512
    $region29: #{tpu_custom_call.1} parent=1 // pred_fallthru
      _
    %173 = vsyncpa [#allocation3], 1
    %174 = vsyncpa [#allocation4], 1
    %175 = vsyncpa [#allocation7], 1

</llo_original>
